<compile_context>
chip_gen: v7x
topology: tpu7x:2x2x1
jax: 0.10.0
libtpu: 0.0.40
codegen_flags: <defaults>
</compile_context>

<pallas_src>
import jax
import jax.numpy as jnp
from jax import lax
from jax.experimental import pallas as pl
from jax.experimental.pallas import tpu as pltpu

# ----------------------------- config (small, consistent with the module) -----
F = 32          # feat_size == ques_size
H = 32          # seq_hidden_size
N_LAYERS = 1    # n_layers
ATTN_K = 4      # attn_k
T_MAX = 128     # lane-dense history capacity == max sequence length per call
LANES = 128

_NEG = -1e30    # python float (NOT a jnp array) so the kernel captures no constants

# ---- packed weight-slab row layout (f32, [W_ROWS, 128]) ----------------------
ROW_WX = 0                 # rows [0, 2F)     : W_ih^T  [2F, 3H]  in lanes [0, 3H)
ROW_WH = 2 * F             # rows [2F, 2F+H)  : W_hh^T  [H, 3H]   in lanes [0, 3H)
ROW_BIH = ROW_WH + H       # row 96           : b_ih               in lanes [0, 3H)
ROW_BHH = ROW_BIH + 1      # row 97           : b_hh               in lanes [0, 3H)
ROW_SC = ROW_BHH + 1       # row 98           : [w_s_q (F) | w_s_h (H) | b_s (1)]
ROW_H0 = ROW_SC + 1        # row 99           : initial_h          in lanes [0, H)
W_ROWS = 104               # padded up to a multiple of 8 sublanes


def sp_seq_kernel(
    svals_ref,   # SMEM f32 [n_steps] : given score per step (0 if none)
    sflag_ref,   # SMEM i32 [n_steps] : 1 if a score was given at that step
    q_ref,       # VMEM [T_MAX, F]    : question sequence (zero padded)
    qt_ref,      # VMEM [F, T_MAX]    : question sequence, feature-major
    w_ref,       # VMEM [W_ROWS, 128] : packed weight slab
    pred_ref,    # out  [T_MAX, 1]    : per-step predictions (VMEM-resident)
    hs_ref,      # out  [T_MAX, H]    : per-step hidden states == attention history
    hprev_scr,   # scratch VMEM [1, H]: hidden state carried between steps
):
    t = pl.program_id(0)

    # ---- step 0: zero resident outputs and seed h_prev with initial_h --------
    @pl.when(t == 0)
    def _():
        pred_ref[...] = jnp.zeros((T_MAX, 1), jnp.float32)
        hs_ref[...] = jnp.zeros((T_MAX, H), jnp.float32)
        hprev_scr[...] = w_ref[ROW_H0:ROW_H0 + 1, 0:H]

    q = q_ref[pl.ds(t, 1), :]        # [1, F]  current question
    h_prev = hprev_scr[...]          # [1, H]

    # ---- attention logits over past questions (rows/cols for rank compare) ---
    alpha_row = jnp.dot(q, qt_ref[...], preferred_element_type=jnp.float32)       # [1, T_MAX]
    alpha_col = lax.dot_general(q_ref[...], q, (((1,), (1,)), ((), ())),
                                preferred_element_type=jnp.float32)               # [T_MAX, 1]
    lane = lax.broadcasted_iota(jnp.int32, (1, T_MAX), 1)
    sub = lax.broadcasted_iota(jnp.int32, (T_MAX, 1), 0)
    alpha_row = jnp.where(lane < t, alpha_row, _NEG)   # only positions < t are history
    alpha_col = jnp.where(sub < t, alpha_col, _NEG)

    # ---- exact top-k selection via one-shot rank ------------------------------
    # rank[t'] = #{ j != t' : a[j] > a[t']  or  (a[j] == a[t'] and j < t') }
    pos_j = lax.broadcasted_iota(jnp.int32, (T_MAX, T_MAX), 0)
    pos_t = lax.broadcasted_iota(jnp.int32, (T_MAX, T_MAX), 1)
    beats = ((alpha_col > alpha_row) & (pos_j != pos_t)) | \
            ((alpha_col == alpha_row) & (pos_j < pos_t))
    rank = jnp.sum(beats.astype(jnp.float32), axis=0, keepdims=True)              # [1, T_MAX]
    sel = rank < float(ATTN_K)
    # Padded / surplus picks sit at _NEG -> exp underflows to exactly 0, so this is
    # identical to torch.topk(min(t, k)) + softmax.

    # ---- masked softmax + weighted sum of past hidden states ------------------
    m_sel = jnp.max(jnp.where(sel, alpha_row, _NEG), axis=-1, keepdims=True)
    e = jnp.where(sel, jnp.exp(alpha_row - m_sel), 0.0)
    w_attn = e / jnp.sum(e, axis=-1, keepdims=True)
    attn_hist = jnp.dot(w_attn, hs_ref[...], preferred_element_type=jnp.float32)  # [1, H]
    attn_h = jnp.where(t > 0, attn_hist, h_prev)       # no history yet -> initial_h

    # ---- score head: Linear([question ; attn_h]) with the concat pre-split ----
    wsq = w_ref[ROW_SC:ROW_SC + 1, 0:F]
    wsh = w_ref[ROW_SC:ROW_SC + 1, F:F + H]
    bs = w_ref[ROW_SC:ROW_SC + 1, F + H:F + H + 1]
    pred = jnp.sum(q * wsq + attn_h * wsh, axis=-1, keepdims=True) + bs            # [1, 1]
    pred_ref[pl.ds(t, 1), :] = pred

    # ---- GRU cell step (2 fused matmuls for all 3 gates) ----------------------
    score_given = jnp.full((1, 1), svals_ref[t], dtype=jnp.float32)
    score_eff = jnp.where(sflag_ref[t] != 0, score_given, pred)
    g = (score_eff >= 0.5).astype(jnp.float32)
    x = jnp.concatenate([q * g, q * (1.0 - g)], axis=-1)                            # [1, 2F]

    gi = jnp.dot(x, w_ref[ROW_WX:ROW_WX + 2 * F, :],
                 preferred_element_type=jnp.float32) + w_ref[ROW_BIH:ROW_BIH + 1, :]
    gh = jnp.dot(h_prev, w_ref[ROW_WH:ROW_WH + H, :],
                 preferred_element_type=jnp.float32) + w_ref[ROW_BHH:ROW_BHH + 1, :]
    r = jax.nn.sigmoid(gi[:, 0:H] + gh[:, 0:H])
    z = jax.nn.sigmoid(gi[:, H:2 * H] + gh[:, H:2 * H])
    n = jnp.tanh(gi[:, 2 * H:3 * H] + r * gh[:, 2 * H:3 * H])
    h_new = (1.0 - z) * n + z * h_prev                                              # [1, H]

    hs_ref[pl.ds(t, 1), :] = h_new
    hprev_scr[...] = h_new


def build_sp_sequence_call(n_steps):
    smem = pl.BlockSpec(memory_space=pltpu.MemorySpace.SMEM)
    grid_spec = pltpu.PrefetchScalarGridSpec(
        num_scalar_prefetch=0,
        grid=(n_steps,),
        in_specs=[
            smem,                                              # score values
            smem,                                              # has-score flags
            pl.BlockSpec((T_MAX, F), lambda t: (0, 0)),        # questions
            pl.BlockSpec((F, T_MAX), lambda t: (0, 0)),        # questions^T
            pl.BlockSpec((W_ROWS, LANES), lambda t: (0, 0)),   # packed weights
        ],
        out_specs=(
            pl.BlockSpec((T_MAX, 1), lambda t: (0, 0)),        # preds (resident)
            pl.BlockSpec((T_MAX, H), lambda t: (0, 0)),        # hidden states (resident)
        ),
        scratch_shapes=[pltpu.VMEM((1, H), jnp.float32)],
    )
    return pl.pallas_call(
        sp_seq_kernel,
        out_shape=(jax.ShapeDtypeStruct((T_MAX, 1), jnp.float32),
                   jax.ShapeDtypeStruct((T_MAX, H), jnp.float32)),
        grid_spec=grid_spec,
        compiler_params=pltpu.CompilerParams(dimension_semantics=("arbitrary",)),
    )


def pack_weight_slab(p):
    """Pack all parameters into one lane-dense [W_ROWS, 128] VMEM slab (host side)."""
    slab = jnp.zeros((W_ROWS, LANES), jnp.float32)
    slab = slab.at[ROW_WX:ROW_WX + 2 * F, 0:3 * H].set(p["w_ih"].T)   # [2F, 3H]
    slab = slab.at[ROW_WH:ROW_WH + H, 0:3 * H].set(p["w_hh"].T)       # [H, 3H]
    slab = slab.at[ROW_BIH, 0:3 * H].set(p["b_ih"])
    slab = slab.at[ROW_BHH, 0:3 * H].set(p["b_hh"])
    slab = slab.at[ROW_SC, 0:F].set(p["w_s"][0, :F])
    slab = slab.at[ROW_SC, F:F + H].set(p["w_s"][0, F:])
    slab = slab.at[ROW_SC, F + H].set(p["b_s"][0])
    slab = slab.at[ROW_H0, 0:H].set(p["init_h"])
    return slab


def sp_forward_sequence(weight_slab, questions, scores):
    """Run a whole sequence (== calling SP.forward once per step, hidden threaded through).

    questions: [T, F] float32; scores: python list of length T with None or float.
    Returns (preds [T], hidden=(qs [T,F], hs [T,H])) exactly like stacking per-step outputs.
    """
    n_steps = questions.shape[0]
    if not (1 <= n_steps <= T_MAX):
        raise ValueError("sequence length must be in [1, T_MAX]")
    if len(scores) != n_steps:
        raise ValueError("scores must have one entry per step")

    q_pad = jnp.zeros((T_MAX, F), jnp.float32).at[:n_steps, :].set(questions)
    qt_pad = q_pad.T
    svals = jnp.asarray([0.0 if s is None else float(s) for s in scores], dtype=jnp.float32)
    sflag = jnp.asarray([0 if s is None else 1 for s in scores], dtype=jnp.int32)

    call = build_sp_sequence_call(n_steps)
    preds_pad, hs_pad = call(svals, sflag, q_pad, qt_pad, weight_slab)

    preds = preds_pad[:n_steps, 0]
    hidden = (questions, hs_pad[:n_steps, :])
    return preds, hidden


# ----------------------------- pure-JAX reference (for validation) ------------
def sp_forward_ref(p, ques_h, score, hidden=None):
    hp = jax.lax.Precision.HIGHEST
    if hidden is None:
        h_prev = p["init_h"]
        attn_h = p["init_h"]
    else:
        qs, hs = hidden
        h_prev = hs[-1]
        alpha = jnp.dot(qs, ques_h, precision=hp)
        k = min(qs.shape[0], ATTN_K)
        vals, idx = jax.lax.top_k(alpha, k)
        w = jax.nn.softmax(vals)
        attn_h = jnp.dot(w, hs[idx], precision=hp)
    pred_v = jnp.concatenate([ques_h, attn_h])
    pred = jnp.dot(p["w_s"], pred_v, precision=hp) + p["b_s"]          # [1]
    s_eff = pred[0] if score is None else jnp.float32(score)
    gate = (s_eff >= 0.5).astype(jnp.float32)
    x = jnp.concatenate([ques_h * gate, ques_h * (1.0 - gate)])
    gi = jnp.dot(p["w_ih"], x, precision=hp) + p["b_ih"]
    gh = jnp.dot(p["w_hh"], h_prev, precision=hp) + p["b_hh"]
    i_r, i_z, i_n = jnp.split(gi, 3)
    h_r, h_z, h_n = jnp.split(gh, 3)
    r = jax.nn.sigmoid(i_r + h_r)
    z = jax.nn.sigmoid(i_z + h_z)
    n = jnp.tanh(i_n + r * h_n)
    h_new = (1.0 - z) * n + z * h_prev
    if hidden is None:
        new_hidden = (ques_h[None, :], h_new[None, :])
    else:
        new_hidden = (jnp.concatenate([qs, ques_h[None, :]], 0),
                      jnp.concatenate([hs, h_new[None, :]], 0))
    return pred, new_hidden


if __name__ == "__main__":
    key = jax.random.PRNGKey(0)
    kp = jax.random.split(key, 8)

    def w(k, shape, scale=0.2):
        return (scale * jax.random.normal(k, shape)).astype(jnp.float32)

    params = {
        "w_ih":   w(kp[0], (3 * H, 2 * F)),    # GRU weight_ih_l0 (gate order r|z|n)
        "w_hh":   w(kp[1], (3 * H, H)),        # GRU weight_hh_l0
        "b_ih":   w(kp[2], (3 * H,)),
        "b_hh":   w(kp[3], (3 * H,)),
        "w_s":    w(kp[4], (1, F + H)),        # score_net Linear
        "b_s":    w(kp[5], (1,)),
        "init_h": w(kp[6], (N_LAYERS * H,)),   # initial_h parameter
    }
    weight_slab = pack_weight_slab(params)

    n_steps = 8
    questions = jax.random.normal(kp[7], (n_steps, F), dtype=jnp.float32)
    scores = [None, 1.0, 0.0, None, 1.0, 0.0, None, 1.0]

    # ---- fused Pallas kernel: whole sequence in one call ----------------------
    preds_k, (qs_k, hs_k) = sp_forward_sequence(weight_slab, questions, scores)
    preds_k = jax.block_until_ready(preds_k)
    hs_k = jax.block_until_ready(hs_k)

    # ---- step-by-step pure-JAX reference --------------------------------------
    hidden_r = None
    preds_r_list = []
    for step in range(n_steps):
        pred_r, hidden_r = sp_forward_ref(params, questions[step], scores[step], hidden_r)
        preds_r_list.append(pred_r[0])
    preds_r = jnp.stack(preds_r_list)
    qs_r, hs_r = hidden_r

    assert preds_k.shape == (n_steps,)
    assert qs_k.shape == (n_steps, F) and hs_k.shape == (n_steps, H)
    p_err = float(jnp.max(jnp.abs(preds_k - preds_r)))
    h_err = float(jnp.max(jnp.abs(hs_k - hs_r)))
    assert p_err < 1e-3, ("pred mismatch", p_err)
    assert h_err < 1e-3, ("hidden mismatch", h_err)
    assert bool(jnp.allclose(qs_k, qs_r))
    print("KERNEL_OK")
</pallas_src>

<mosaic_0001>
module attributes {stable_mosaic.version = 11 : i64} {
  func.func @sp_seq_kernel(%arg0: i32, %arg1: memref<8xf32, #tpu.memory_space<smem>>, %arg2: memref<8xi32, #tpu.memory_space<smem>>, %arg3: memref<128x32xf32, #tpu.memory_space<vmem>>, %arg4: memref<32x128xf32, #tpu.memory_space<vmem>>, %arg5: memref<104x128xf32, #tpu.memory_space<vmem>>, %arg6: memref<128x1xf32, #tpu.memory_space<vmem>>, %arg7: memref<128x32xf32, #tpu.memory_space<vmem>>, %arg8: memref<1x32xf32, #tpu.memory_space<vmem>>) attributes {dimension_semantics = [#tpu.dimension_semantics<arbitrary>], iteration_bounds = array<i64: 8>, scalar_prefetch = 0 : i64, scratch_operands = 1 : i64, tpu.core_type = #tpu.core_type<tc>, window_params = [{transform_indices = @transform_0, window_bounds = array<i64: 8>}, {transform_indices = @transform_1, window_bounds = array<i64: 8>}, {pipeline_mode = #tpu.pipeline_mode<synchronous>, transform_indices = @transform_2, window_bounds = array<i64: 128, 32>}, {pipeline_mode = #tpu.pipeline_mode<synchronous>, transform_indices = @transform_3, window_bounds = array<i64: 32, 128>}, {pipeline_mode = #tpu.pipeline_mode<synchronous>, transform_indices = @transform_4, window_bounds = array<i64: 104, 128>}, {pipeline_mode = #tpu.pipeline_mode<synchronous>, transform_indices = @transform_5, window_bounds = array<i64: 128, 1>}, {pipeline_mode = #tpu.pipeline_mode<synchronous>, transform_indices = @transform_6, window_bounds = array<i64: 128, 32>}]} {
    %c0_i32 = arith.constant 0 : i32
    %0 = arith.cmpi eq, %arg0, %c0_i32 : i32
    %1 = arith.extui %0 : i1 to i32
    %c0_i32_0 = arith.constant 0 : i32
    %2 = arith.cmpi ne, %1, %c0_i32_0 : i32
    scf.if %2 {
      %cst_42 = arith.constant 0.000000e+00 : f32
      %122 = vector.broadcast %cst_42 : f32 to vector<128x1xf32>
      %c0_43 = arith.constant 0 : index
      %c0_44 = arith.constant 0 : index
      %123 = vector.load %arg6[%c0_43, %c0_44] : memref<128x1xf32, #tpu.memory_space<vmem>>, vector<128x1xf32>
      tpu.vector_store %arg6[%c0_43, %c0_44], %122 {strides = array<i32>} : memref<128x1xf32, #tpu.memory_space<vmem>>, vector<128x1xf32>,
      %cst_45 = arith.constant 0.000000e+00 : f32
      %124 = vector.broadcast %cst_45 : f32 to vector<128x32xf32>
      %c0_46 = arith.constant 0 : index
      %c0_47 = arith.constant 0 : index
      %125 = vector.load %arg7[%c0_46, %c0_47] : memref<128x32xf32, #tpu.memory_space<vmem>>, vector<128x32xf32>
      tpu.vector_store %arg7[%c0_46, %c0_47], %124 {strides = array<i32>} : memref<128x32xf32, #tpu.memory_space<vmem>>, vector<128x32xf32>,
      %c99 = arith.constant 99 : index
      %c0_48 = arith.constant 0 : index
      %126 = vector.load %arg5[%c99, %c0_48] : memref<104x128xf32, #tpu.memory_space<vmem>>, vector<1x32xf32>
      %c0_49 = arith.constant 0 : index
      %c0_50 = arith.constant 0 : index
      %127 = vector.load %arg8[%c0_49, %c0_50] : memref<1x32xf32, #tpu.memory_space<vmem>>, vector<1x32xf32>
      tpu.vector_store %arg8[%c0_49, %c0_50], %126 {strides = array<i32>} : memref<1x32xf32, #tpu.memory_space<vmem>>, vector<1x32xf32>,
    } else {
    }
    %3 = arith.index_cast %arg0 : i32 to index
    %c0 = arith.constant 0 : index
    %4 = vector.load %arg3[%3, %c0] : memref<128x32xf32, #tpu.memory_space<vmem>>, vector<1x32xf32>
    %c0_1 = arith.constant 0 : index
    %c0_2 = arith.constant 0 : index
    %5 = vector.load %arg8[%c0_1, %c0_2] : memref<1x32xf32, #tpu.memory_space<vmem>>, vector<1x32xf32>
    %c0_3 = arith.constant 0 : index
    %c0_4 = arith.constant 0 : index
    %6 = vector.load %arg4[%c0_3, %c0_4] : memref<32x128xf32, #tpu.memory_space<vmem>>, vector<32x128xf32>
    %cst = arith.constant dense<0.000000e+00> : vector<1x128xf32>
    %7 = tpu.matmul %4, %6, %cst {dimension_numbers = #tpu.dot_dimension_numbers<[1], [0], [0], [1], [0, 0, 1, 1], [], []>} : vector<1x32xf32>, vector<32x128xf32>, vector<1x128xf32> -> vector<1x128xf32>
    %c0_5 = arith.constant 0 : index
    %c0_6 = arith.constant 0 : index
    %8 = vector.load %arg3[%c0_5, %c0_6] : memref<128x32xf32, #tpu.memory_space<vmem>>, vector<128x32xf32>
    %cst_7 = arith.constant dense<0.000000e+00> : vector<128x1xf32>
    %9 = tpu.matmul %8, %4, %cst_7 {dimension_numbers = #tpu.dot_dimension_numbers<[1], [1], [0], [0], [0, 0, 1, 0], [], []>} : vector<128x32xf32>, vector<1x32xf32>, vector<128x1xf32> -> vector<128x1xf32>
    %10 = tpu.iota {dimensions = array<i32: 1>} : vector<1x128xi32>
    %11 = tpu.iota {dimensions = array<i32: 0>} : vector<128x1xi32>
    %12 = vector.broadcast %arg0 : i32 to vector<1x128xi32>
    %13 = arith.cmpi slt, %10, %12 : vector<1x128xi32>
    %cst_8 = arith.constant -1.000000e+30 : f32
    %14 = vector.broadcast %cst_8 : f32 to vector<1x128xf32>
    %15 = arith.select %13, %7, %14 : vector<1x128xi1>, vector<1x128xf32>
    %16 = vector.broadcast %arg0 : i32 to vector<128x1xi32>
    %17 = arith.cmpi slt, %11, %16 : vector<128x1xi32>
    %cst_9 = arith.constant -1.000000e+30 : f32
    %18 = vector.broadcast %cst_9 : f32 to vector<128x1xf32>
    %19 = arith.select %17, %9, %18 : vector<128x1xi1>, vector<128x1xf32>
    %20 = tpu.iota {dimensions = array<i32: 0>} : vector<128x128xi32>
    %21 = tpu.iota {dimensions = array<i32: 1>} : vector<128x128xi32>
    %22 = vector.broadcast %19 : vector<128x1xf32> to vector<128x128xf32>
    %23 = vector.broadcast %15 : vector<1x128xf32> to vector<128x128xf32>
    %24 = arith.cmpf ogt, %22, %23 : vector<128x128xf32>
    %25 = arith.cmpi ne, %20, %21 : vector<128x128xi32>
    %26 = arith.andi %24, %25 : vector<128x128xi1>
    %27 = vector.broadcast %19 : vector<128x1xf32> to vector<128x128xf32>
    %28 = vector.broadcast %15 : vector<1x128xf32> to vector<128x128xf32>
    %29 = arith.cmpf oeq, %27, %28 : vector<128x128xf32>
    %30 = arith.cmpi slt, %20, %21 : vector<128x128xi32>
    %31 = arith.andi %29, %30 : vector<128x128xi1>
    %32 = arith.ori %26, %31 : vector<128x128xi1>
    %33 = arith.extui %32 : vector<128x128xi1> to vector<128x128xi32>
    %34 = arith.sitofp %33 : vector<128x128xi32> to vector<128x128xf32>
    %cst_10 = arith.constant dense<0.000000e+00> : vector<128xf32>
    %35 = vector.multi_reduction <add>, %34, %cst_10 [0] : vector<128x128xf32> to vector<128xf32>
    %36 = vector.shape_cast %35 : vector<128xf32> to vector<1x128xf32>
    %cst_11 = arith.constant 4.000000e+00 : f32
    %37 = vector.broadcast %cst_11 : f32 to vector<1x128xf32>
    %38 = arith.cmpf olt, %36, %37 : vector<1x128xf32>
    %cst_12 = arith.constant -1.000000e+30 : f32
    %39 = vector.broadcast %cst_12 : f32 to vector<1x128xf32>
    %40 = arith.select %38, %15, %39 : vector<1x128xi1>, vector<1x128xf32>
    %cst_13 = arith.constant dense<0xFF800000> : vector<1xf32>
    %41 = vector.multi_reduction <maximumf>, %40, %cst_13 [1] : vector<1x128xf32> to vector<1xf32>
    %42 = vector.shape_cast %41 : vector<1xf32> to vector<1x1xf32>
    %43 = vector.broadcast %42 : vector<1x1xf32> to vector<1x128xf32>
    %44 = arith.subf %15, %43 : vector<1x128xf32>
    %45 = math.exp %44 : vector<1x128xf32>
    %cst_14 = arith.constant 0.000000e+00 : f32
    %46 = vector.broadcast %cst_14 : f32 to vector<1x128xf32>
    %47 = arith.select %38, %45, %46 : vector<1x128xi1>, vector<1x128xf32>
    %cst_15 = arith.constant dense<0.000000e+00> : vector<1xf32>
    %48 = vector.multi_reduction <add>, %47, %cst_15 [1] : vector<1x128xf32> to vector<1xf32>
    %49 = vector.shape_cast %48 : vector<1xf32> to vector<1x1xf32>
    %50 = vector.broadcast %49 : vector<1x1xf32> to vector<1x128xf32>
    %51 = arith.divf %47, %50 : vector<1x128xf32>
    %c0_16 = arith.constant 0 : index
    %c0_17 = arith.constant 0 : index
    %52 = vector.load %arg7[%c0_16, %c0_17] : memref<128x32xf32, #tpu.memory_space<vmem>>, vector<128x32xf32>
    %cst_18 = arith.constant dense<0.000000e+00> : vector<1x32xf32>
    %53 = tpu.matmul %51, %52, %cst_18 {dimension_numbers = #tpu.dot_dimension_numbers<[1], [0], [0], [1], [0, 0, 1, 1], [], []>} : vector<1x128xf32>, vector<128x32xf32>, vector<1x32xf32> -> vector<1x32xf32>
    %c0_i32_19 = arith.constant 0 : i32
    %54 = arith.cmpi sgt, %arg0, %c0_i32_19 : i32
    %55 = arith.select %54, %53, %5 : vector<1x32xf32>
    %c98 = arith.constant 98 : index
    %c0_20 = arith.constant 0 : index
    %56 = vector.load %arg5[%c98, %c0_20] : memref<104x128xf32, #tpu.memory_space<vmem>>, vector<1x32xf32>
    %c98_21 = arith.constant 98 : index
    %c32 = arith.constant 32 : index
    %57 = vector.load %arg5[%c98_21, %c32] : memref<104x128xf32, #tpu.memory_space<vmem>>, vector<1x32xf32>
    %c98_22 = arith.constant 98 : index
    %c64 = arith.constant 64 : index
    %58 = vector.load %arg5[%c98_22, %c64] : memref<104x128xf32, #tpu.memory_space<vmem>>, vector<1x1xf32>
    %59 = arith.mulf %4, %56 : vector<1x32xf32>
    %60 = arith.mulf %55, %57 : vector<1x32xf32>
    %61 = arith.addf %59, %60 : vector<1x32xf32>
    %cst_23 = arith.constant dense<0.000000e+00> : vector<1xf32>
    %62 = vector.multi_reduction <add>, %61, %cst_23 [1] : vector<1x32xf32> to vector<1xf32>
    %63 = vector.shape_cast %62 : vector<1xf32> to vector<1x1xf32>
    %64 = arith.addf %63, %58 : vector<1x1xf32>
    %65 = arith.index_cast %arg0 : i32 to index
    %c0_24 = arith.constant 0 : index
    %66 = vector.load %arg6[%65, %c0_24] : memref<128x1xf32, #tpu.memory_space<vmem>>, vector<1x1xf32>
    tpu.vector_store %arg6[%65, %c0_24], %64 {strides = array<i32>} : memref<128x1xf32, #tpu.memory_space<vmem>>, vector<1x1xf32>,
    %67 = arith.index_cast %arg0 : i32 to index
    %68 = memref.load %arg1[%67] : memref<8xf32, #tpu.memory_space<smem>>
    %69 = vector.broadcast %68 : f32 to vector<1x1xf32>
    %70 = arith.index_cast %arg0 : i32 to index
    %71 = memref.load %arg2[%70] : memref<8xi32, #tpu.memory_space<smem>>
    %c0_i32_25 = arith.constant 0 : i32
    %72 = arith.cmpi ne, %71, %c0_i32_25 : i32
    %73 = arith.select %72, %69, %64 : vector<1x1xf32>
    %cst_26 = arith.constant 5.000000e-01 : f32
    %74 = vector.broadcast %cst_26 : f32 to vector<1x1xf32>
    %75 = arith.cmpf oge, %73, %74 : vector<1x1xf32>
    %76 = arith.extui %75 : vector<1x1xi1> to vector<1x1xi32>
    %77 = arith.sitofp %76 : vector<1x1xi32> to vector<1x1xf32>
    %78 = vector.broadcast %77 : vector<1x1xf32> to vector<1x32xf32>
    %79 = arith.mulf %4, %78 : vector<1x32xf32>
    %cst_27 = arith.constant 1.000000e+00 : f32
    %80 = vector.broadcast %cst_27 : f32 to vector<1x1xf32>
    %81 = arith.subf %80, %77 : vector<1x1xf32>
    %82 = vector.broadcast %81 : vector<1x1xf32> to vector<1x32xf32>
    %83 = arith.mulf %4, %82 : vector<1x32xf32>
    %84 = tpu.concatenate %79, %83 in 1 : vector<1x32xf32>, vector<1x32xf32> -> vector<1x64xf32>
    %c0_28 = arith.constant 0 : index
    %c0_29 = arith.constant 0 : index
    %85 = vector.load %arg5[%c0_28, %c0_29] : memref<104x128xf32, #tpu.memory_space<vmem>>, vector<64x128xf32>
    %cst_30 = arith.constant dense<0.000000e+00> : vector<1x128xf32>
    %86 = tpu.matmul %84, %85, %cst_30 {dimension_numbers = #tpu.dot_dimension_numbers<[1], [0], [0], [1], [0, 0, 1, 1], [], []>} : vector<1x64xf32>, vector<64x128xf32>, vector<1x128xf32> -> vector<1x128xf32>
    %c96 = arith.constant 96 : index
    %c0_31 = arith.constant 0 : index
    %87 = vector.load %arg5[%c96, %c0_31] : memref<104x128xf32, #tpu.memory_space<vmem>>, vector<1x128xf32>
    %88 = arith.addf %86, %87 : vector<1x128xf32>
    %c64_32 = arith.constant 64 : index
    %c0_33 = arith.constant 0 : index
    %89 = vector.load %arg5[%c64_32, %c0_33] : memref<104x128xf32, #tpu.memory_space<vmem>>, vector<32x128xf32>
    %cst_34 = arith.constant dense<0.000000e+00> : vector<1x128xf32>
    %90 = tpu.matmul %5, %89, %cst_34 {dimension_numbers = #tpu.dot_dimension_numbers<[1], [0], [0], [1], [0, 0, 1, 1], [], []>} : vector<1x32xf32>, vector<32x128xf32>, vector<1x128xf32> -> vector<1x128xf32>
    %c97 = arith.constant 97 : index
    %c0_35 = arith.constant 0 : index
    %91 = vector.load %arg5[%c97, %c0_35] : memref<104x128xf32, #tpu.memory_space<vmem>>, vector<1x128xf32>
    %92 = arith.addf %90, %91 : vector<1x128xf32>
    %93 = vector.extract_strided_slice %88 {offsets = [0, 0], sizes = [1, 32], strides = [1, 1]} : vector<1x128xf32> to vector<1x32xf32>
    %94 = vector.extract_strided_slice %92 {offsets = [0, 0], sizes = [1, 32], strides = [1, 1]} : vector<1x128xf32> to vector<1x32xf32>
    %95 = arith.addf %93, %94 : vector<1x32xf32>
    %96 = arith.negf %95 : vector<1x32xf32>
    %97 = math.exp %96 : vector<1x32xf32>
    %cst_36 = arith.constant 1.000000e+00 : f32
    %98 = vector.broadcast %cst_36 : f32 to vector<1x32xf32>
    %99 = arith.addf %98, %97 : vector<1x32xf32>
    %100 = arith.divf %98, %99 : vector<1x32xf32>
    %101 = vector.extract_strided_slice %88 {offsets = [0, 32], sizes = [1, 32], strides = [1, 1]} : vector<1x128xf32> to vector<1x32xf32>
    %102 = vector.extract_strided_slice %92 {offsets = [0, 32], sizes = [1, 32], strides = [1, 1]} : vector<1x128xf32> to vector<1x32xf32>
    %103 = arith.addf %101, %102 : vector<1x32xf32>
    %104 = arith.negf %103 : vector<1x32xf32>
    %105 = math.exp %104 : vector<1x32xf32>
    %cst_37 = arith.constant 1.000000e+00 : f32
    %106 = vector.broadcast %cst_37 : f32 to vector<1x32xf32>
    %107 = arith.addf %106, %105 : vector<1x32xf32>
    %108 = arith.divf %106, %107 : vector<1x32xf32>
    %109 = vector.extract_strided_slice %88 {offsets = [0, 64], sizes = [1, 32], strides = [1, 1]} : vector<1x128xf32> to vector<1x32xf32>
    %110 = vector.extract_strided_slice %92 {offsets = [0, 64], sizes = [1, 32], strides = [1, 1]} : vector<1x128xf32> to vector<1x32xf32>
    %111 = arith.mulf %100, %110 : vector<1x32xf32>
    %112 = arith.addf %109, %111 : vector<1x32xf32>
    %113 = math.tanh %112 : vector<1x32xf32>
    %cst_38 = arith.constant 1.000000e+00 : f32
    %114 = vector.broadcast %cst_38 : f32 to vector<1x32xf32>
    %115 = arith.subf %114, %108 : vector<1x32xf32>
    %116 = arith.mulf %115, %113 : vector<1x32xf32>
    %117 = arith.mulf %108, %5 : vector<1x32xf32>
    %118 = arith.addf %116, %117 : vector<1x32xf32>
    %119 = arith.index_cast %arg0 : i32 to index
    %c0_39 = arith.constant 0 : index
    %120 = vector.load %arg7[%119, %c0_39] : memref<128x32xf32, #tpu.memory_space<vmem>>, vector<1x32xf32>
    tpu.vector_store %arg7[%119, %c0_39], %118 {strides = array<i32>} : memref<128x32xf32, #tpu.memory_space<vmem>>, vector<1x32xf32>,
    %c0_40 = arith.constant 0 : index
    %c0_41 = arith.constant 0 : index
    %121 = vector.load %arg8[%c0_40, %c0_41] : memref<1x32xf32, #tpu.memory_space<vmem>>, vector<1x32xf32>
    tpu.vector_store %arg8[%c0_40, %c0_41], %118 {strides = array<i32>} : memref<1x32xf32, #tpu.memory_space<vmem>>, vector<1x32xf32>,
    return
  }
  func.func @transform_0(%arg0: i32) -> i32 {
    %c0_i32 = arith.constant 0 : i32
    %c0_i32_0 = arith.constant 0 : i32
    return %c0_i32 : i32
  }
  func.func @transform_1(%arg0: i32) -> i32 {
    %c0_i32 = arith.constant 0 : i32
    %c0_i32_0 = arith.constant 0 : i32
    return %c0_i32 : i32
  }
  func.func @transform_2(%arg0: i32) -> (i32, i32) {
    %c0_i32 = arith.constant 0 : i32
    %c0_i32_0 = arith.constant 0 : i32
    %c0_i32_1 = arith.constant 0 : i32
    return %c0_i32, %c0_i32_0 : i32, i32
  }
  func.func @transform_3(%arg0: i32) -> (i32, i32) {
    %c0_i32 = arith.constant 0 : i32
    %c0_i32_0 = arith.constant 0 : i32
    %c0_i32_1 = arith.constant 0 : i32
    return %c0_i32, %c0_i32_0 : i32, i32
  }
  func.func @transform_4(%arg0: i32) -> (i32, i32) {
    %c0_i32 = arith.constant 0 : i32
    %c0_i32_0 = arith.constant 0 : i32
    %c0_i32_1 = arith.constant 0 : i32
    return %c0_i32, %c0_i32_0 : i32, i32
  }
  func.func @transform_5(%arg0: i32) -> (i32, i32) {
    %c0_i32 = arith.constant 0 : i32
    %c0_i32_0 = arith.constant 0 : i32
    %c0_i32_1 = arith.constant 0 : i32
    return %c0_i32, %c0_i32_0 : i32, i32
  }
  func.func @transform_6(%arg0: i32) -> (i32, i32) {
    %c0_i32 = arith.constant 0 : i32
    %c0_i32_0 = arith.constant 0 : i32
    %c0_i32_1 = arith.constant 0 : i32
    return %c0_i32, %c0_i32_0 : i32, i32
  }
}

</mosaic_0001>

<llo_original>
// kernel: tpu_custom_call.1
$region0: #{tpu_custom_call.1}
  #allocation0 [shape = 'u32[]', space=smem, size = 0x4, offset = 0x4, fixed_abs, tag = 'smem constant byte address 0x4 - core index']
  #allocation1 [shape = 'u32[144,128]{1,0:T(1,128)}', space=vmem, size = 0x12000, scoped, tag = 'internal scratch']
  #allocation2 [shape = 'f32[1,32]{1,0:T(1,128)}', space=vmem, size = 0x200, scoped, tag = 'scratch operand']
  %s0 = inlined_call_operand.vmem [shape: f32[8], index: 0, kind: input, shape index: {}]
  %s1 = inlined_call_operand.vmem [shape: s32[8], index: 1, kind: input, shape index: {}]
  %s2 = inlined_call_operand.vmem [shape: f32[128,32], index: 2, kind: input, shape index: {}]
  %s3 = inlined_call_operand.vmem [shape: f32[32,128], index: 3, kind: input, shape index: {}]
  %s4 = inlined_call_operand.vmem [shape: f32[104,128], index: 4, kind: input, shape index: {}]
  %s5 = inlined_call_operand.vmem [shape: f32[128,1], index: 5, kind: output, shape index: {0}]
  %s6 = inlined_call_operand.vmem [shape: f32[128,32], index: 6, kind: output, shape index: {1}]
  %7 = xla_tuple %s5, %s6
  %s8 = sld [smem:[#allocation0]]
  $region73: #{tpu_custom_call.1} parent=0
    _
  %s10 = ssub.s32 1, %s8
  %s11 = scalar_select 0, %s10, %s8
  $region1: #{tpu_custom_call.1} parent=0
    #allocation3 [shape = 'u8[512]{0}', space=smem, size = 0x200, scoped, tag = 'input window, operand 0, single buffered']
    #allocation4 [shape = 's32[2]{0}', space=sflag, size = 0x8, scoped, tag = 'scoped memory for tpu_custom_call.1']
    #allocation5 [shape = 'u8[512]{0}', space=smem, size = 0x200, scoped, tag = 'input window, operand 1, single buffered']
    #allocation6 [shape = 's32[1]{0}', space=sflag, size = 0x4, scoped, tag = 'scoped memory for tpu_custom_call.1']
    %12 = vsyncpa [#allocation4], 0
    %13 = vsyncpa [#allocation6], 0
    loop: start=0, step=1, limit=10
    $region2: #{tpu_custom_call.1} parent=1 // loop_pre_header
      _
    $region3: #{tpu_custom_call.1} parent=1 // loop_header
      %s15 = sphi 0, %s19
      %p16 = scmp.ge.s32.totalorder %s15, 10
      %s23 = sphi 0, %s23
      %s25 = sphi 0, %s23
      %s26 = sphi 0, %s25
      %s40 = sphi 0, %s26
      %s44 = sphi 0, %s44
      %s46 = sphi 0, %s44
      %s47 = sphi 0, %s46
      %s61 = sphi 0, %s47
      %s65 = sphi 0, %s65
      %s67 = sphi 0, %s65
      %s68 = sphi 0, %s67
      %s82 = sphi 0, %s68
      %s86 = sphi 0, %s86
      %s88 = sphi 0, %s86
      %s89 = sphi 0, %s88
      %s103 = sphi 0, %s89
      %s107 = sphi 0, %s107
      %s109 = sphi 0, %s107
      %s110 = sphi 0, %s109
      %s124 = sphi 0, %s110
      %s128 = sphi 0, %s128
      %s130 = sphi 0, %s128
      %s131 = sphi 0, %s130
      %s145 = sphi 0, %s131
      %s149 = sphi 0, %s149
      %s151 = sphi 0, %s149
      %s152 = sphi 0, %s151
      %s166 = sphi 0, %s152
    $region4: #{tpu_custom_call.1} parent=1 // loop_header_branch
      %18 = sbr.rel (%p16) target = $region8
    $region5: #{tpu_custom_call.1} parent=1 // loop_body
      %s20 = ssub.s32 %s15, 1
      %s21 = ssub.s32 %s15, 2
      %s22 = sadd.s32 %s15, 1
      %s24 = sadd.s32 %s23, 1
      %p27 = scmp.eq.s32.totalorder %s15, 7
      %p28 = scmp.ne.s32.totalorder %s23, %s25
      %p29 = scmp.eq.s32.totalorder %s15, 0
      %p30 = por %p28, %p29
      %p31 = scmp.ne.s32.totalorder %s23, %s25
      %p32 = scmp.eq.s32.totalorder %s20, 7
      %p33 = por %p31, %p32
      %p34 = scmp.ne.s32.totalorder %s25, %s26
      %p35 = scmp.eq.s32.totalorder %s20, 0
      %p36 = por %p34, %p35
      %p37 = scmp.ne.s32.totalorder %s25, %s26
      %p38 = scmp.eq.s32.totalorder %s21, 7
      %p39 = por %p37, %p38
      %p41 = scmp.ne.s32.totalorder %s26, %s40
      %p42 = scmp.eq.s32.totalorder %s21, 0
      %p43 = por %p41, %p42
      %s45 = sadd.s32 %s44, 1
      %p48 = scmp.eq.s32.totalorder %s15, 7
      %p49 = scmp.ne.s32.totalorder %s44, %s46
      %p50 = scmp.eq.s32.totalorder %s15, 0
      %p51 = por %p49, %p50
      %p52 = scmp.ne.s32.totalorder %s44, %s46
      %p53 = scmp.eq.s32.totalorder %s20, 7
      %p54 = por %p52, %p53
      %p55 = scmp.ne.s32.totalorder %s46, %s47
      %p56 = scmp.eq.s32.totalorder %s20, 0
      %p57 = por %p55, %p56
      %p58 = scmp.ne.s32.totalorder %s46, %s47
      %p59 = scmp.eq.s32.totalorder %s21, 7
      %p60 = por %p58, %p59
      %p62 = scmp.ne.s32.totalorder %s47, %s61
      %p63 = scmp.eq.s32.totalorder %s21, 0
      %p64 = por %p62, %p63
      %s66 = sadd.s32 %s65, 1
      %p69 = scmp.eq.s32.totalorder %s15, 7
      %p70 = scmp.ne.s32.totalorder %s65, %s67
      %p71 = scmp.eq.s32.totalorder %s15, 0
      %p72 = por %p70, %p71
      %p73 = scmp.ne.s32.totalorder %s65, %s67
      %p74 = scmp.eq.s32.totalorder %s20, 7
      %p75 = por %p73, %p74
      %p76 = scmp.ne.s32.totalorder %s67, %s68
      %p77 = scmp.eq.s32.totalorder %s20, 0
      %p78 = por %p76, %p77
      %p79 = scmp.ne.s32.totalorder %s67, %s68
      %p80 = scmp.eq.s32.totalorder %s21, 7
      %p81 = por %p79, %p80
      %p83 = scmp.ne.s32.totalorder %s68, %s82
      %p84 = scmp.eq.s32.totalorder %s21, 0
      %p85 = por %p83, %p84
      %s87 = sadd.s32 %s86, 1
      %p90 = scmp.eq.s32.totalorder %s15, 7
      %p91 = scmp.ne.s32.totalorder %s86, %s88
      %p92 = scmp.eq.s32.totalorder %s15, 0
      %p93 = por %p91, %p92
      %p94 = scmp.ne.s32.totalorder %s86, %s88
      %p95 = scmp.eq.s32.totalorder %s20, 7
      %p96 = por %p94, %p95
      %p97 = scmp.ne.s32.totalorder %s88, %s89
      %p98 = scmp.eq.s32.totalorder %s20, 0
      %p99 = por %p97, %p98
      %p100 = scmp.ne.s32.totalorder %s88, %s89
      %p101 = scmp.eq.s32.totalorder %s21, 7
      %p102 = por %p100, %p101
      %p104 = scmp.ne.s32.totalorder %s89, %s103
      %p105 = scmp.eq.s32.totalorder %s21, 0
      %p106 = por %p104, %p105
      %s108 = sadd.s32 %s107, 1
      %p111 = scmp.eq.s32.totalorder %s15, 7
      %p112 = scmp.ne.s32.totalorder %s107, %s109
      %p113 = scmp.eq.s32.totalorder %s15, 0
      %p114 = por %p112, %p113
      %p115 = scmp.ne.s32.totalorder %s107, %s109
      %p116 = scmp.eq.s32.totalorder %s20, 7
      %p117 = por %p115, %p116
      %p118 = scmp.ne.s32.totalorder %s109, %s110
      %p119 = scmp.eq.s32.totalorder %s20, 0
      %p120 = por %p118, %p119
      %p121 = scmp.ne.s32.totalorder %s109, %s110
      %p122 = scmp.eq.s32.totalorder %s21, 7
      %p123 = por %p121, %p122
      %p125 = scmp.ne.s32.totalorder %s110, %s124
      %p126 = scmp.eq.s32.totalorder %s21, 0
      %p127 = por %p125, %p126
      %s129 = sadd.s32 %s128, 1
      %p132 = scmp.eq.s32.totalorder %s15, 7
      %p133 = scmp.ne.s32.totalorder %s128, %s130
      %p134 = scmp.eq.s32.totalorder %s15, 0
      %p135 = por %p133, %p134
      %p136 = scmp.ne.s32.totalorder %s128, %s130
      %p137 = scmp.eq.s32.totalorder %s20, 7
      %p138 = por %p136, %p137
      %p139 = scmp.ne.s32.totalorder %s130, %s131
      %p140 = scmp.eq.s32.totalorder %s20, 0
      %p141 = por %p139, %p140
      %p142 = scmp.ne.s32.totalorder %s130, %s131
      %p143 = scmp.eq.s32.totalorder %s21, 7
      %p144 = por %p142, %p143
      %p146 = scmp.ne.s32.totalorder %s131, %s145
      %p147 = scmp.eq.s32.totalorder %s21, 0
      %p148 = por %p146, %p147
      %s150 = sadd.s32 %s149, 1
      %p153 = scmp.eq.s32.totalorder %s15, 7
      %p154 = scmp.ne.s32.totalorder %s149, %s151
      %p155 = scmp.eq.s32.totalorder %s15, 0
      %p156 = por %p154, %p155
      %p157 = scmp.ne.s32.totalorder %s149, %s151
      %p158 = scmp.eq.s32.totalorder %s20, 7
      %p159 = por %p157, %p158
      %p160 = scmp.ne.s32.totalorder %s151, %s152
      %p161 = scmp.eq.s32.totalorder %s20, 0
      %p162 = por %p160, %p161
      %p163 = scmp.ne.s32.totalorder %s151, %s152
      %p164 = scmp.eq.s32.totalorder %s21, 7
      %p165 = por %p163, %p164
      %p167 = scmp.ne.s32.totalorder %s152, %s166
      %p168 = scmp.eq.s32.totalorder %s21, 0
      %p169 = por %p167, %p168
      %p170 = scmp.le.s32.totalorder 1, %s15
      %p171 = scmp.lt.s32.totalorder %s15, 9
      %p172 = pnand %p170, %p171
      %p173 = pneg %p172
      // Predicated region
      $region9: #{tpu_custom_call.1} parent=5 // pred_check
        _
      $region10: #{tpu_custom_call.1} parent=5 // pred_check_branch
        %175 = sbr.rel (%p172) target = $region12
      $region11: #{tpu_custom_call.1} parent=5 // pred_region
        %s176 = ssub.s32 %s15, 1
        // Predicated region
        $region13: #{tpu_custom_call.1} parent=11 // pred_check
          %p177 = pneg %p36
        $region14: #{tpu_custom_call.1} parent=11 // pred_check_branch
          %179 = sbr.rel (%p177) target = $region16
        $region15: #{tpu_custom_call.1} parent=11 // pred_region
          %s181 = ssub.s32 16, 16
          %182 = vsyncadd [#allocation4], %s181
          %s184 = sshll.u32 %s0, 4
          %s185 = int_to_ptr.vmem [resolvable:$true] %s184
          %187 = dma.vmem_to_smem %s185, 16, [#allocation3], [#allocation4]
        $region16: #{tpu_custom_call.1} parent=11 // pred_fallthru
          _
        // Predicated region
        $region17: #{tpu_custom_call.1} parent=11 // pred_check
          %p188 = pneg %p57
        $region18: #{tpu_custom_call.1} parent=11 // pred_check_branch
          %190 = sbr.rel (%p188) target = $region20
        $region19: #{tpu_custom_call.1} parent=11 // pred_region
          %s192 = ssub.s32 16, 16
          %193 = vsyncadd [#allocation6], %s192
          %s195 = sshll.u32 %s1, 4
          %s196 = int_to_ptr.vmem [resolvable:$true] %s195
          %198 = dma.vmem_to_smem %s196, 16, [#allocation5], [#allocation6]
        $region20: #{tpu_custom_call.1} parent=11 // pred_fallthru
          _
        // Predicated region
        $region21: #{tpu_custom_call.1} parent=11 // pred_check
          %p199 = pneg %p78
        $region22: #{tpu_custom_call.1} parent=11 // pred_check_branch
          %201 = sbr.rel (%p199) target = $region24
        $region23: #{tpu_custom_call.1} parent=11 // pred_region
          _
        $region24: #{tpu_custom_call.1} parent=11 // pred_fallthru
          _
        // Predicated region
        $region25: #{tpu_custom_call.1} parent=11 // pred_check
          %p202 = pneg %p99
        $region26: #{tpu_custom_call.1} parent=11 // pred_check_branch
          %204 = sbr.rel (%p202) target = $region28
        $region27: #{tpu_custom_call.1} parent=11 // pred_region
          _
        $region28: #{tpu_custom_call.1} parent=11 // pred_fallthru
          _
        // Predicated region
        $region29: #{tpu_custom_call.1} parent=11 // pred_check
          %p205 = pneg %p120
        $region30: #{tpu_custom_call.1} parent=11 // pred_check_branch
          %207 = sbr.rel (%p205) target = $region32
        $region31: #{tpu_custom_call.1} parent=11 // pred_region
          _
        $region32: #{tpu_custom_call.1} parent=11 // pred_fallthru
          _
      $region12: #{tpu_custom_call.1} parent=5 // pred_fallthru
        _
      %p208 = scmp.lt.s32.totalorder %s15, 8
      // Predicated region
      $region33: #{tpu_custom_call.1} parent=5 // pred_check
        %p209 = pneg %p208
      $region34: #{tpu_custom_call.1} parent=5 // pred_check_branch
        %211 = sbr.rel (%p209) target = $region36
      $region35: #{tpu_custom_call.1} parent=5 // pred_region
        _
      $region36: #{tpu_custom_call.1} parent=5 // pred_fallthru
        _
      %p212 = scmp.le.s32.totalorder 1, %s15
      %p213 = scmp.lt.s32.totalorder %s15, 9
      %p214 = pnand %p212, %p213
      %p215 = pneg %p214
      // Predicated region
      $region37: #{tpu_custom_call.1} parent=5 // pred_check
        _
      $region38: #{tpu_custom_call.1} parent=5 // pred_check_branch
        %217 = sbr.rel (%p214) target = $region40
      $region39: #{tpu_custom_call.1} parent=5 // pred_region
        %s218 = ssub.s32 %s15, 1
        // Predicated region
        $region41: #{tpu_custom_call.1} parent=39 // pred_check
          %p219 = pneg %p36
        $region42: #{tpu_custom_call.1} parent=39 // pred_check_branch
          %221 = sbr.rel (%p219) target = $region44
        $region43: #{tpu_custom_call.1} parent=39 // pred_region
          %222 = dma.done [#allocation4], 16
        $region44: #{tpu_custom_call.1} parent=39 // pred_fallthru
          _
        // Predicated region
        $region45: #{tpu_custom_call.1} parent=39 // pred_check
          %p223 = pneg %p57
        $region46: #{tpu_custom_call.1} parent=39 // pred_check_branch
          %225 = sbr.rel (%p223) target = $region48
        $region47: #{tpu_custom_call.1} parent=39 // pred_region
          %226 = dma.done [#allocation6], 16
        $region48: #{tpu_custom_call.1} parent=39 // pred_fallthru
          _
        %227 = sfence
        %p228 = pneg %p36
        %p229 = pneg %p33
        %p230 = pneg %p57
        %p231 = pneg %p54
        %p232 = pneg %p78
        %p233 = pneg %p75
        %p234 = pneg %p99
        %p235 = pneg %p96
        %p236 = pneg %p120
        %p237 = pneg %p117
        %p238 = pneg %p141
        %p239 = pneg %p138
        %p240 = pneg %p162
        %p241 = pneg %p159
        %p242 = scmp.eq.s32.totalorder %s20, 0
        // Predicated region
        $region49: #{tpu_custom_call.1} parent=39 // pred_check
          %p243 = pneg %p242
        $region50: #{tpu_custom_call.1} parent=39 // pred_check_branch
          %245 = sbr.rel (%p243) target = $region52
        $region51: #{tpu_custom_call.1} parent=39 // pred_region
          %vm246 = vcmask 7168
          %247 = vst.msk [vmem:[%s5] sm:$0xff] %vm246, 0.0
          %248 = vst.msk [vmem:[%s5 + $0x8] sm:$0xff] %vm246, 0.0
          %249 = vst.msk [vmem:[%s5 + $0x10] sm:$0xff] %vm246, 0.0
          %250 = vst.msk [vmem:[%s5 + $0x18] sm:$0xff] %vm246, 0.0
          %251 = vst.msk [vmem:[%s5 + $0x20] sm:$0xff] %vm246, 0.0
          %252 = vst.msk [vmem:[%s5 + $0x28] sm:$0xff] %vm246, 0.0
          %253 = vst.msk [vmem:[%s5 + $0x30] sm:$0xff] %vm246, 0.0
          %254 = vst.msk [vmem:[%s5 + $0x38] sm:$0xff] %vm246, 0.0
          %255 = vst.msk [vmem:[%s5 + $0x40] sm:$0xff] %vm246, 0.0
          %256 = vst.msk [vmem:[%s5 + $0x48] sm:$0xff] %vm246, 0.0
          %257 = vst.msk [vmem:[%s5 + $0x50] sm:$0xff] %vm246, 0.0
          %258 = vst.msk [vmem:[%s5 + $0x58] sm:$0xff] %vm246, 0.0
          %259 = vst.msk [vmem:[%s5 + $0x60] sm:$0xff] %vm246, 0.0
          %260 = vst.msk [vmem:[%s5 + $0x68] sm:$0xff] %vm246, 0.0
          %261 = vst.msk [vmem:[%s5 + $0x70] sm:$0xff] %vm246, 0.0
          %262 = vst.msk [vmem:[%s5 + $0x78] sm:$0xff] %vm246, 0.0
          %vm263 = vcmask 261120
          %264 = vst.msk [vmem:[%s6] sm:$0xff] %vm263, 0.0
          %265 = vst.msk [vmem:[%s6 + $0x8] sm:$0xff] %vm263, 0.0
          %266 = vst.msk [vmem:[%s6 + $0x10] sm:$0xff] %vm263, 0.0
          %267 = vst.msk [vmem:[%s6 + $0x18] sm:$0xff] %vm263, 0.0
          %268 = vst.msk [vmem:[%s6 + $0x20] sm:$0xff] %vm263, 0.0
          %269 = vst.msk [vmem:[%s6 + $0x28] sm:$0xff] %vm263, 0.0
          %270 = vst.msk [vmem:[%s6 + $0x30] sm:$0xff] %vm263, 0.0
          %271 = vst.msk [vmem:[%s6 + $0x38] sm:$0xff] %vm263, 0.0
          %272 = vst.msk [vmem:[%s6 + $0x40] sm:$0xff] %vm263, 0.0
          %273 = vst.msk [vmem:[%s6 + $0x48] sm:$0xff] %vm263, 0.0
          %274 = vst.msk [vmem:[%s6 + $0x50] sm:$0xff] %vm263, 0.0
          %275 = vst.msk [vmem:[%s6 + $0x58] sm:$0xff] %vm263, 0.0
          %276 = vst.msk [vmem:[%s6 + $0x60] sm:$0xff] %vm263, 0.0
          %277 = vst.msk [vmem:[%s6 + $0x68] sm:$0xff] %vm263, 0.0
          %278 = vst.msk [vmem:[%s6 + $0x70] sm:$0xff] %vm263, 0.0
          %279 = vst.msk [vmem:[%s6 + $0x78] sm:$0xff] %vm263, 0.0
          %v280 = vld [vmem:[%s4 + $0x63] sm:$0x1]
          %vm281 = vcmask 253952
          %282 = vst.msk [vmem:[#allocation2] sm:$0x1] %vm281, %v280
        $region52: #{tpu_custom_call.1} parent=39 // pred_fallthru
          _
        %s283 = scalar_lea.vmem %s2, %s20
        %v284 = vld [vmem:[%s283] sm:$0x1]
        %v285 = vld [vmem:[#allocation2] sm:$0x1]
        %v286 = vld [vmem:[%s3] sm:$0xff]
        %v287 = vld [vmem:[%s3 + $0x8] sm:$0xff]
        %v288 = vld [vmem:[%s3 + $0x10] sm:$0xff]
        %v289 = vld [vmem:[%s3 + $0x18] sm:$0xff]
        %vm290 = vcmask 261120
        %v292 = vsel %vm290, %v284, 0
        %294 = vmatprep.subr.mxu0 0.0
        %295 = vmatpush1.msra.mxu0 %v286
        %296 = vmatprep.subr.mxu0 0.0
        %297 = vmatpush1.msra.mxu0 %v287
        %298 = vmatprep.subr.mxu0 0.0
        %299 = vmatpush1.msra.mxu0 %v288
        %300 = vmatprep.subr.mxu0 0.0
        %301 = vmatpush1.msra.mxu0 %v289
        %302 = vmatprep.subr.mxu0 0.0
        %303 = vmatpush1.msra.mxu0 0.0
        %304 = vmatprep.subr.mxu0 0.0
        %305 = vmatpush1.msra.mxu0 0.0
        %306 = vmatprep.subr.mxu0 0.0
        %307 = vmatpush1.msra.mxu0 0.0
        %308 = vmatprep.subr.mxu0 0.0
        %309 = vmatpush1.msra.mxu0 0.0
        %310 = vmatprep.subr.mxu0 0.0
        %311 = vmatpush1.msra.mxu0 0.0
        %312 = vmatprep.subr.mxu0 0.0
        %313 = vmatpush1.msra.mxu0 0.0
        %314 = vmatprep.subr.mxu0 0.0
        %315 = vmatpush1.msra.mxu0 0.0
        %316 = vmatprep.subr.mxu0 0.0
        %317 = vmatpush1.msra.mxu0 0.0
        %318 = vmatprep.subr.mxu0 0.0
        %319 = vmatpush1.msra.mxu0 0.0
        %320 = vmatprep.subr.mxu0 0.0
        %321 = vmatpush1.msra.mxu0 0.0
        %322 = vmatprep.subr.mxu0 0.0
        %323 = vmatpush1.msra.mxu0 0.0
        %324 = vmatprep.subr.mxu0 0.0
        %325 = vmatpush1.msra.mxu0 0.0
        %326 = vmatprep.subr.mxu0 0.0
        %327 = vmatpush1.msra.mxu0 0.0
        %328 = vmatprep.subr.mxu0 0.0
        %329 = vmatpush1.msra.mxu0 0.0
        %330 = vmatprep.subr.mxu0 0.0
        %331 = vmatpush1.msra.mxu0 0.0
        %332 = vmatprep.subr.mxu0 0.0
        %333 = vmatpush1.msra.mxu0 0.0
        %334 = vmatprep.subr.mxu0 0.0
        %335 = vmatpush1.msra.mxu0 0.0
        %336 = vmatprep.subr.mxu0 0.0
        %337 = vmatpush1.msra.mxu0 0.0
        %338 = vmatprep.subr.mxu0 0.0
        %339 = vmatpush1.msra.mxu0 0.0
        %340 = vmatprep.subr.mxu0 0.0
        %341 = vmatpush1.msra.mxu0 0.0
        %342 = vmatprep.subr.mxu0 0.0
        %343 = vmatpush1.msra.mxu0 0.0
        %344 = vmatprep.subr.mxu0 0.0
        %345 = vmatpush1.msra.mxu0 0.0
        %346 = vmatprep.subr.mxu0 0.0
        %347 = vmatpush1.msra.mxu0 0.0
        %348 = vmatprep.subr.mxu0 0.0
        %349 = vmatpush1.msra.mxu0 0.0
        %350 = vmatprep.subr.mxu0 0.0
        %351 = vmatpush1.msra.mxu0 0.0
        %352 = vmatprep.subr.mxu0 0.0
        %353 = vmatpush1.msra.mxu0 0.0
        %354 = vmatprep.subr.mxu0 0.0
        %355 = vmatpush1.msra.mxu0 0.0
        %356 = vmatprep.subr.mxu0 0.0
        %357 = vmatpush1.msra.mxu0 0.0
        %358 = vmatprep.mubr.f32.mxu0 0.0
        %359 = vmatmul.mubr.f32.gmra.mrb[0].mxu0 %v292
        %v360 = vpop.f32.mrb[0].mxu0
        %v361 = vadd.f32 0.0, %v360
        %v362 = vpop.f32.mrb[0].mxu0
        %363 = vdwg.mxu0
        %v364 = vld [vmem:[%s2] sm:$0xff]
        %v365 = vld [vmem:[%s2 + $0x8] sm:$0xff]
        %v366 = vld [vmem:[%s2 + $0x10] sm:$0xff]
        %v367 = vld [vmem:[%s2 + $0x18] sm:$0xff]
        %v368 = vld [vmem:[%s2 + $0x20] sm:$0xff]
        %v369 = vld [vmem:[%s2 + $0x28] sm:$0xff]
        %v370 = vld [vmem:[%s2 + $0x30] sm:$0xff]
        %v371 = vld [vmem:[%s2 + $0x38] sm:$0xff]
        %v372 = vld [vmem:[%s2 + $0x40] sm:$0xff]
        %v373 = vld [vmem:[%s2 + $0x48] sm:$0xff]
        %v374 = vld [vmem:[%s2 + $0x50] sm:$0xff]
        %v375 = vld [vmem:[%s2 + $0x58] sm:$0xff]
        %v376 = vld [vmem:[%s2 + $0x60] sm:$0xff]
        %v377 = vld [vmem:[%s2 + $0x68] sm:$0xff]
        %v378 = vld [vmem:[%s2 + $0x70] sm:$0xff]
        %v379 = vld [vmem:[%s2 + $0x78] sm:$0xff]
        %v380 = vlaneseq
        %v381 = vshrl.u32 %v380, 7
        %v382 = vsub.s32 0, %v381
        %v383 = vrot.slane %v284, %v382
        %v384 = vmul.f32 %v364, %v383
        %v385 = vmul.f32 %v365, %v383
        %v386 = vmul.f32 %v366, %v383
        %v387 = vmul.f32 %v367, %v383
        %v388 = vmul.f32 %v368, %v383
        %v389 = vmul.f32 %v369, %v383
        %v390 = vmul.f32 %v370, %v383
        %v391 = vmul.f32 %v371, %v383
        %v392 = vmul.f32 %v372, %v383
        %v393 = vmul.f32 %v373, %v383
        %v394 = vmul.f32 %v374, %v383
        %v395 = vmul.f32 %v375, %v383
        %v396 = vmul.f32 %v376, %v383
        %v397 = vmul.f32 %v377, %v383
        %v398 = vmul.f32 %v378, %v383
        %v399 = vmul.f32 %v379, %v383
        %v400 = vsel %vm290, %v384, 0.0
        %401 = vadd.xlane.f32.xlu0 %v400
        %v402 = vpop.xlane.xlu0 %401
        %v403 = vsel %vm290, %v385, 0.0
        %404 = vadd.xlane.f32.xlu0 %v403
        %v405 = vpop.xlane.xlu0 %404
        %v406 = vsel %vm290, %v386, 0.0
        %407 = vadd.xlane.f32.xlu0 %v406
        %v408 = vpop.xlane.xlu0 %407
        %v409 = vsel %vm290, %v387, 0.0
        %410 = vadd.xlane.f32.xlu0 %v409
        %v411 = vpop.xlane.xlu0 %410
        %v412 = vsel %vm290, %v388, 0.0
        %413 = vadd.xlane.f32.xlu0 %v412
        %v414 = vpop.xlane.xlu0 %413
        %v415 = vsel %vm290, %v389, 0.0
        %416 = vadd.xlane.f32.xlu0 %v415
        %v417 = vpop.xlane.xlu0 %416
        %v418 = vsel %vm290, %v390, 0.0
        %419 = vadd.xlane.f32.xlu0 %v418
        %v420 = vpop.xlane.xlu0 %419
        %v421 = vsel %vm290, %v391, 0.0
        %422 = vadd.xlane.f32.xlu0 %v421
        %v423 = vpop.xlane.xlu0 %422
        %v424 = vsel %vm290, %v392, 0.0
        %425 = vadd.xlane.f32.xlu0 %v424
        %v426 = vpop.xlane.xlu0 %425
        %v427 = vsel %vm290, %v393, 0.0
        %428 = vadd.xlane.f32.xlu0 %v427
        %v429 = vpop.xlane.xlu0 %428
        %v430 = vsel %vm290, %v394, 0.0
        %431 = vadd.xlane.f32.xlu0 %v430
        %v432 = vpop.xlane.xlu0 %431
        %v433 = vsel %vm290, %v395, 0.0
        %434 = vadd.xlane.f32.xlu0 %v433
        %v435 = vpop.xlane.xlu0 %434
        %v436 = vsel %vm290, %v396, 0.0
        %437 = vadd.xlane.f32.xlu0 %v436
        %v438 = vpop.xlane.xlu0 %437
        %v439 = vsel %vm290, %v397, 0.0
        %440 = vadd.xlane.f32.xlu0 %v439
        %v441 = vpop.xlane.xlu0 %440
        %v442 = vsel %vm290, %v398, 0.0
        %443 = vadd.xlane.f32.xlu0 %v442
        %v444 = vpop.xlane.xlu0 %443
        %v445 = vsel %vm290, %v399, 0.0
        %446 = vadd.xlane.f32.xlu0 %v445
        %v447 = vpop.xlane.xlu0 %446
        %v448 = vlaneseq
        %v449 = vand.u32 %v448, 127
        %v450 = vlaneseq
        %v451 = vshrl.u32 %v450, 7
        %v452 = vadd.s32 %v451, 8
        %v453 = vadd.s32 %v451, 16
        %v454 = vadd.s32 %v451, 24
        %v455 = vadd.s32 %v451, 32
        %v456 = vadd.s32 %v451, 40
        %v457 = vadd.s32 %v451, 48
        %v458 = vadd.s32 %v451, 56
        %v459 = vadd.s32 %v451, 64
        %v460 = vadd.s32 %v451, 72
        %v461 = vadd.s32 %v451, 80
        %v462 = vadd.s32 %v451, 88
        %v463 = vadd.s32 %v451, 96
        %v464 = vadd.s32 %v451, 104
        %v465 = vadd.s32 %v451, 112
        %v466 = vadd.s32 %v451, 120
        %v467 = vstv %s20
        %vm468 = vcmp.lt.s32.totalorder %v449, %v467
        %v469 = vsel %vm468, %v361, -1e+30
        %vm470 = vcmp.lt.s32.totalorder %v451, %v467
        %vm471 = vcmp.lt.s32.totalorder %v452, %v467
        %vm472 = vcmp.lt.s32.totalorder %v453, %v467
        %vm473 = vcmp.lt.s32.totalorder %v454, %v467
        %vm474 = vcmp.lt.s32.totalorder %v455, %v467
        %vm475 = vcmp.lt.s32.totalorder %v456, %v467
        %vm476 = vcmp.lt.s32.totalorder %v457, %v467
        %vm477 = vcmp.lt.s32.totalorder %v458, %v467
        %vm478 = vcmp.lt.s32.totalorder %v459, %v467
        %vm479 = vcmp.lt.s32.totalorder %v460, %v467
        %vm480 = vcmp.lt.s32.totalorder %v461, %v467
        %vm481 = vcmp.lt.s32.totalorder %v462, %v467
        %vm482 = vcmp.lt.s32.totalorder %v463, %v467
        %vm483 = vcmp.lt.s32.totalorder %v464, %v467
        %vm484 = vcmp.lt.s32.totalorder %v465, %v467
        %vm485 = vcmp.lt.s32.totalorder %v466, %v467
        %v486 = vsel %vm470, %v402, -1e+30
        %v487 = vsel %vm471, %v405, -1e+30
        %v488 = vsel %vm472, %v408, -1e+30
        %v489 = vsel %vm473, %v411, -1e+30
        %v490 = vsel %vm474, %v414, -1e+30
        %v491 = vsel %vm475, %v417, -1e+30
        %v492 = vsel %vm476, %v420, -1e+30
        %v493 = vsel %vm477, %v423, -1e+30
        %v494 = vsel %vm478, %v426, -1e+30
        %v495 = vsel %vm479, %v429, -1e+30
        %v496 = vsel %vm480, %v432, -1e+30
        %v497 = vsel %vm481, %v435, -1e+30
        %v498 = vsel %vm482, %v438, -1e+30
        %v499 = vsel %vm483, %v441, -1e+30
        %v500 = vsel %vm484, %v444, -1e+30
        %v501 = vsel %vm485, %v447, -1e+30
        %v502 = vlaneseq
        %v503 = vshrl.u32 %v502, 7
        %v504 = vsub.s32 0, %v503
        %v505 = vrot.slane %v469, %v504
        %vm506 = vcmp.gt.f32.partialorder %v486, %v505
        %vm507 = vcmp.gt.f32.partialorder %v487, %v505
        %vm508 = vcmp.gt.f32.partialorder %v488, %v505
        %vm509 = vcmp.gt.f32.partialorder %v489, %v505
        %vm510 = vcmp.gt.f32.partialorder %v490, %v505
        %vm511 = vcmp.gt.f32.partialorder %v491, %v505
        %vm512 = vcmp.gt.f32.partialorder %v492, %v505
        %vm513 = vcmp.gt.f32.partialorder %v493, %v505
        %vm514 = vcmp.gt.f32.partialorder %v494, %v505
        %vm515 = vcmp.gt.f32.partialorder %v495, %v505
        %vm516 = vcmp.gt.f32.partialorder %v496, %v505
        %vm517 = vcmp.gt.f32.partialorder %v497, %v505
        %vm518 = vcmp.gt.f32.partialorder %v498, %v505
        %vm519 = vcmp.gt.f32.partialorder %v499, %v505
        %vm520 = vcmp.gt.f32.partialorder %v500, %v505
        %vm521 = vcmp.gt.f32.partialorder %v501, %v505
        %vm522 = vcmp.ne.s32.totalorder %v451, %v449
        %vm523 = vcmp.ne.s32.totalorder %v452, %v449
        %vm524 = vcmp.ne.s32.totalorder %v453, %v449
        %vm525 = vcmp.ne.s32.totalorder %v454, %v449
        %vm526 = vcmp.ne.s32.totalorder %v455, %v449
        %vm527 = vcmp.ne.s32.totalorder %v456, %v449
        %vm528 = vcmp.ne.s32.totalorder %v457, %v449
        %vm529 = vcmp.ne.s32.totalorder %v458, %v449
        %vm530 = vcmp.ne.s32.totalorder %v459, %v449
        %vm531 = vcmp.ne.s32.totalorder %v460, %v449
        %vm532 = vcmp.ne.s32.totalorder %v461, %v449
        %vm533 = vcmp.ne.s32.totalorder %v462, %v449
        %vm534 = vcmp.ne.s32.totalorder %v463, %v449
        %vm535 = vcmp.ne.s32.totalorder %v464, %v449
        %vm536 = vcmp.ne.s32.totalorder %v465, %v449
        %vm537 = vcmp.ne.s32.totalorder %v466, %v449
        %vm538 = vmand %vm506, %vm522
        %vm539 = vmand %vm507, %vm523
        %vm540 = vmand %vm508, %vm524
        %vm541 = vmand %vm509, %vm525
        %vm542 = vmand %vm510, %vm526
        %vm543 = vmand %vm511, %vm527
        %vm544 = vmand %vm512, %vm528
        %vm545 = vmand %vm513, %vm529
        %vm546 = vmand %vm514, %vm530
        %vm547 = vmand %vm515, %vm531
        %vm548 = vmand %vm516, %vm532
        %vm549 = vmand %vm517, %vm533
        %vm550 = vmand %vm518, %vm534
        %vm551 = vmand %vm519, %vm535
        %vm552 = vmand %vm520, %vm536
        %vm553 = vmand %vm521, %vm537
        %vm554 = vcmp.eq.f32.partialorder %v486, %v505
        %vm555 = vcmp.eq.f32.partialorder %v487, %v505
        %vm556 = vcmp.eq.f32.partialorder %v488, %v505
        %vm557 = vcmp.eq.f32.partialorder %v489, %v505
        %vm558 = vcmp.eq.f32.partialorder %v490, %v505
        %vm559 = vcmp.eq.f32.partialorder %v491, %v505
        %vm560 = vcmp.eq.f32.partialorder %v492, %v505
        %vm561 = vcmp.eq.f32.partialorder %v493, %v505
        %vm562 = vcmp.eq.f32.partialorder %v494, %v505
        %vm563 = vcmp.eq.f32.partialorder %v495, %v505
        %vm564 = vcmp.eq.f32.partialorder %v496, %v505
        %vm565 = vcmp.eq.f32.partialorder %v497, %v505
        %vm566 = vcmp.eq.f32.partialorder %v498, %v505
        %vm567 = vcmp.eq.f32.partialorder %v499, %v505
        %vm568 = vcmp.eq.f32.partialorder %v500, %v505
        %vm569 = vcmp.eq.f32.partialorder %v501, %v505
        %vm570 = vcmp.lt.s32.totalorder %v451, %v449
        %vm571 = vcmp.lt.s32.totalorder %v452, %v449
        %vm572 = vcmp.lt.s32.totalorder %v453, %v449
        %vm573 = vcmp.lt.s32.totalorder %v454, %v449
        %vm574 = vcmp.lt.s32.totalorder %v455, %v449
        %vm575 = vcmp.lt.s32.totalorder %v456, %v449
        %vm576 = vcmp.lt.s32.totalorder %v457, %v449
        %vm577 = vcmp.lt.s32.totalorder %v458, %v449
        %vm578 = vcmp.lt.s32.totalorder %v459, %v449
        %vm579 = vcmp.lt.s32.totalorder %v460, %v449
        %vm580 = vcmp.lt.s32.totalorder %v461, %v449
        %vm581 = vcmp.lt.s32.totalorder %v462, %v449
        %vm582 = vcmp.lt.s32.totalorder %v463, %v449
        %vm583 = vcmp.lt.s32.totalorder %v464, %v449
        %vm584 = vcmp.lt.s32.totalorder %v465, %v449
        %vm585 = vcmp.lt.s32.totalorder %v466, %v449
        %vm586 = vmand %vm554, %vm570
        %vm587 = vmand %vm555, %vm571
        %vm588 = vmand %vm556, %vm572
        %vm589 = vmand %vm557, %vm573
        %vm590 = vmand %vm558, %vm574
        %vm591 = vmand %vm559, %vm575
        %vm592 = vmand %vm560, %vm576
        %vm593 = vmand %vm561, %vm577
        %vm594 = vmand %vm562, %vm578
        %vm595 = vmand %vm563, %vm579
        %vm596 = vmand %vm564, %vm580
        %vm597 = vmand %vm565, %vm581
        %vm598 = vmand %vm566, %vm582
        %vm599 = vmand %vm567, %vm583
        %vm600 = vmand %vm568, %vm584
        %vm601 = vmand %vm569, %vm585
        %vm602 = vmor %vm538, %vm586
        %vm603 = vmor %vm539, %vm587
        %vm604 = vmor %vm540, %vm588
        %vm605 = vmor %vm541, %vm589
        %vm606 = vmor %vm542, %vm590
        %vm607 = vmor %vm543, %vm591
        %vm608 = vmor %vm544, %vm592
        %vm609 = vmor %vm545, %vm593
        %vm610 = vmor %vm546, %vm594
        %vm611 = vmor %vm547, %vm595
        %vm612 = vmor %vm548, %vm596
        %vm613 = vmor %vm549, %vm597
        %vm614 = vmor %vm550, %vm598
        %vm615 = vmor %vm551, %vm599
        %vm616 = vmor %vm552, %vm600
        %vm617 = vmor %vm553, %vm601
        %v618 = vsel %vm602, 1, 0
        %v619 = vsel %vm603, 1, 0
        %v620 = vsel %vm604, 1, 0
        %v621 = vsel %vm605, 1, 0
        %v622 = vsel %vm606, 1, 0
        %v623 = vsel %vm607, 1, 0
        %v624 = vsel %vm608, 1, 0
        %v625 = vsel %vm609, 1, 0
        %v626 = vsel %vm610, 1, 0
        %v627 = vsel %vm611, 1, 0
        %v628 = vsel %vm612, 1, 0
        %v629 = vsel %vm613, 1, 0
        %v630 = vsel %vm614, 1, 0
        %v631 = vsel %vm615, 1, 0
        %v632 = vsel %vm616, 1, 0
        %v633 = vsel %vm617, 1, 0
        %v634 = vcvt.s32.f32 %v618
        %v635 = vcvt.s32.f32 %v619
        %v636 = vcvt.s32.f32 %v620
        %v637 = vcvt.s32.f32 %v621
        %v638 = vcvt.s32.f32 %v622
        %v639 = vcvt.s32.f32 %v623
        %v640 = vcvt.s32.f32 %v624
        %v641 = vcvt.s32.f32 %v625
        %v642 = vcvt.s32.f32 %v626
        %v643 = vcvt.s32.f32 %v627
        %v644 = vcvt.s32.f32 %v628
        %v645 = vcvt.s32.f32 %v629
        %v646 = vcvt.s32.f32 %v630
        %v647 = vcvt.s32.f32 %v631
        %v648 = vcvt.s32.f32 %v632
        %v649 = vcvt.s32.f32 %v633
        %v650 = vadd.f32 %v634, %v635
        %v651 = vadd.f32 %v650, %v636
        %v652 = vadd.f32 %v651, %v637
        %v653 = vadd.f32 %v652, %v638
        %v654 = vadd.f32 %v653, %v639
        %v655 = vadd.f32 %v654, %v640
        %v656 = vadd.f32 %v655, %v641
        %v657 = vadd.f32 %v656, %v642
        %v658 = vadd.f32 %v657, %v643
        %v659 = vadd.f32 %v658, %v644
        %v660 = vadd.f32 %v659, %v645
        %v661 = vadd.f32 %v660, %v646
        %v662 = vadd.f32 %v661, %v647
        %v663 = vadd.f32 %v662, %v648
        %v664 = vadd.f32 %v663, %v649
        %v665 = vrot.slane %v664, 4
        %v666 = vadd.f32 %v664, %v665
        %v667 = vrot.slane %v666, 2
        %v668 = vadd.f32 %v666, %v667
        %v669 = vrot.slane %v668, 1
        %v670 = vadd.f32 %v668, %v669
        %vm671 = vcmp.lt.f32.partialorder %v670, 4.0
        %v672 = vsel %vm671, %v469, -1e+30
        %vm673 = vcmask 1040384
        %v674 = vsel %vm673, %v672, -inf
        %675 = vmax.xlane.f32.xlu0 %v674
        %v676 = vpop.xlane.xlu0 %675
        %v677 = vsub.f32 %v469, %v676
        %v678 = vmul.f32 %v677, 1.442695
        %v679 = vpow.pop %v678
        %v680 = vsel %vm671, %v679, 0.0
        %v681 = vsel %vm673, %v680, 0.0
        %682 = vadd.xlane.f32.xlu0 %v681
        %v683 = vpop.xlane.xlu0 %682
        %v684 = vrcp.pop %v683
        %v685 = vmul.f32 %v680, %v684
        %v686 = vld [vmem:[%s6] sm:$0xff]
        %v687 = vld [vmem:[%s6 + $0x8] sm:$0xff]
        %v688 = vld [vmem:[%s6 + $0x10] sm:$0xff]
        %v689 = vld [vmem:[%s6 + $0x18] sm:$0xff]
        %v690 = vld [vmem:[%s6 + $0x20] sm:$0xff]
        %v691 = vld [vmem:[%s6 + $0x28] sm:$0xff]
        %v692 = vld [vmem:[%s6 + $0x30] sm:$0xff]
        %v693 = vld [vmem:[%s6 + $0x38] sm:$0xff]
        %v694 = vld [vmem:[%s6 + $0x40] sm:$0xff]
        %v695 = vld [vmem:[%s6 + $0x48] sm:$0xff]
        %v696 = vld [vmem:[%s6 + $0x50] sm:$0xff]
        %v697 = vld [vmem:[%s6 + $0x58] sm:$0xff]
        %v698 = vld [vmem:[%s6 + $0x60] sm:$0xff]
        %v699 = vld [vmem:[%s6 + $0x68] sm:$0xff]
        %v700 = vld [vmem:[%s6 + $0x70] sm:$0xff]
        %v701 = vld [vmem:[%s6 + $0x78] sm:$0xff]
        %702 = vmatprep.subr.mxu0 0.0
        %703 = vmatpush1.msra.mxu0 %v686
        %704 = vmatprep.subr.mxu0 0.0
        %705 = vmatpush1.msra.mxu0 %v687
        %706 = vmatprep.subr.mxu0 0.0
        %707 = vmatpush1.msra.mxu0 %v688
        %708 = vmatprep.subr.mxu0 0.0
        %709 = vmatpush1.msra.mxu0 %v689
        %710 = vmatprep.subr.mxu0 0.0
        %711 = vmatpush1.msra.mxu0 %v690
        %712 = vmatprep.subr.mxu0 0.0
        %713 = vmatpush1.msra.mxu0 %v691
        %714 = vmatprep.subr.mxu0 0.0
        %715 = vmatpush1.msra.mxu0 %v692
        %716 = vmatprep.subr.mxu0 0.0
        %717 = vmatpush1.msra.mxu0 %v693
        %718 = vmatprep.subr.mxu0 0.0
        %719 = vmatpush1.msra.mxu0 %v694
        %720 = vmatprep.subr.mxu0 0.0
        %721 = vmatpush1.msra.mxu0 %v695
        %722 = vmatprep.subr.mxu0 0.0
        %723 = vmatpush1.msra.mxu0 %v696
        %724 = vmatprep.subr.mxu0 0.0
        %725 = vmatpush1.msra.mxu0 %v697
        %726 = vmatprep.subr.mxu0 0.0
        %727 = vmatpush1.msra.mxu0 %v698
        %728 = vmatprep.subr.mxu0 0.0
        %729 = vmatpush1.msra.mxu0 %v699
        %730 = vmatprep.subr.mxu0 0.0
        %731 = vmatpush1.msra.mxu0 %v700
        %732 = vmatprep.subr.mxu0 0.0
        %733 = vmatpush1.msra.mxu0 %v701
        %734 = vmatprep.subr.mxu0 0.0
        %735 = vmatpush1.msra.mxu0 0.0
        %736 = vmatprep.subr.mxu0 0.0
        %737 = vmatpush1.msra.mxu0 0.0
        %738 = vmatprep.subr.mxu0 0.0
        %739 = vmatpush1.msra.mxu0 0.0
        %740 = vmatprep.subr.mxu0 0.0
        %741 = vmatpush1.msra.mxu0 0.0
        %742 = vmatprep.subr.mxu0 0.0
        %743 = vmatpush1.msra.mxu0 0.0
        %744 = vmatprep.subr.mxu0 0.0
        %745 = vmatpush1.msra.mxu0 0.0
        %746 = vmatprep.subr.mxu0 0.0
        %747 = vmatpush1.msra.mxu0 0.0
        %748 = vmatprep.subr.mxu0 0.0
        %749 = vmatpush1.msra.mxu0 0.0
        %750 = vmatprep.subr.mxu0 0.0
        %751 = vmatpush1.msra.mxu0 0.0
        %752 = vmatprep.subr.mxu0 0.0
        %753 = vmatpush1.msra.mxu0 0.0
        %754 = vmatprep.subr.mxu0 0.0
        %755 = vmatpush1.msra.mxu0 0.0
        %756 = vmatprep.subr.mxu0 0.0
        %757 = vmatpush1.msra.mxu0 0.0
        %758 = vmatprep.subr.mxu0 0.0
        %759 = vmatpush1.msra.mxu0 0.0
        %760 = vmatprep.subr.mxu0 0.0
        %761 = vmatpush1.msra.mxu0 0.0
        %762 = vmatprep.subr.mxu0 0.0
        %763 = vmatpush1.msra.mxu0 0.0
        %764 = vmatprep.subr.mxu0 0.0
        %765 = vmatpush1.msra.mxu0 0.0
        %766 = vmatprep.mubr.f32.mxu0 0.0
        %767 = vmatmul.mubr.f32.gmra.mrb[0].mxu0 %v685
        %v768 = vpop.f32.mrb[0].mxu0
        %v769 = vadd.f32 0.0, %v768
        %v770 = vpop.f32.mrb[0].mxu0
        %771 = vdwg.mxu0
        %p772 = scmp.gt.s32.totalorder %s20, 0
        %s773 = scalar_select %p772, 1, 0
        %v774 = vstv %s773
        %vm775 = vcmp.eq.s32.totalorder %v774, 1
        %v776 = vsel %vm775, %v769, %v285
        %v777 = vld [vmem:[%s4 + $0x62] sm:$0x1]
        %v778 = vmul.f32 %v284, %v777
        %780 = vrot.lane.b32.xlu0 %v777, 96
        %v781 = vpop.permute.xlu0 %780
        %v783 = vmul.f32 %v776, %v781
        %v784 = vadd.f32 %v778, %v783
        %vm785 = vcmask 253952
        %v786 = vsel %vm785, %v784, 0.0
        %787 = vadd.xlane.f32.xlu0 %v786
        %v788 = vpop.xlane.xlu0 %787
        %v789 = vadd.f32 %v788, %v777
        %791 = vrot.lane.b32.xlu0 %v789, 64
        %v792 = vpop.permute.xlu0 %791
        %s794 = scalar_lea.vmem %s5, %s20
        %vm795 = vcmask 0
        %796 = vst.msk [vmem:[%s794] sm:$0x1] %vm795, %v792
        %s797 = sld [smem:[#allocation3 + %s20]]
        %v798 = vstv %s797
        %s799 = sld [smem:[#allocation5 + %s20]]
        %p800 = scmp.ne.s32.totalorder %s799, 0
        %s801 = scalar_select %p800, 1, 0
        %v802 = vstv %s801
        %vm803 = vcmp.eq.s32.totalorder %v802, 1
        %v804 = vsel %vm803, %v798, %v789
        %vm805 = vcmp.ge.f32.partialorder %v804, 0.5
        %v806 = vsel %vm805, 1, 0
        %v807 = vcvt.s32.f32 %v806
        %809 = vset.pattern.permute.xlu0 64
        %810 = vperm.xlu0 %809, %v807
        %v811 = vpop.permute.xlu0 %810
        %v813 = vmul.f32 %v284, %v811
        %v814 = vsub.f32 1.0, %v807
        %816 = vset.pattern.permute.xlu0 64
        %817 = vperm.xlu0 %816, %v814
        %v818 = vpop.permute.xlu0 %817
        %v820 = vmul.f32 %v284, %v818
        %822 = vrot.lane.b32.xlu0 %v820, 32
        %v823 = vpop.permute.xlu0 %822
        %v825 = vsel %vm290, %v813, %v823
        %v826 = vld [vmem:[%s4] sm:$0xff]
        %v827 = vld [vmem:[%s4 + $0x8] sm:$0xff]
        %v828 = vld [vmem:[%s4 + $0x10] sm:$0xff]
        %v829 = vld [vmem:[%s4 + $0x18] sm:$0xff]
        %v830 = vld [vmem:[%s4 + $0x20] sm:$0xff]
        %v831 = vld [vmem:[%s4 + $0x28] sm:$0xff]
        %v832 = vld [vmem:[%s4 + $0x30] sm:$0xff]
        %v833 = vld [vmem:[%s4 + $0x38] sm:$0xff]
        %v834 = vld [vmem:[%s4 + $0x60] sm:$0x1]
        %vm835 = vcmask 523264
        %v837 = vsel %vm835, %v825, 0
        %839 = vmatprep.subr.mxu0 0.0
        %840 = vmatpush1.msra.mxu0 %v826
        %841 = vmatprep.subr.mxu0 0.0
        %842 = vmatpush1.msra.mxu0 %v827
        %843 = vmatprep.subr.mxu0 0.0
        %844 = vmatpush1.msra.mxu0 %v828
        %845 = vmatprep.subr.mxu0 0.0
        %846 = vmatpush1.msra.mxu0 %v829
        %847 = vmatprep.subr.mxu0 0.0
        %848 = vmatpush1.msra.mxu0 %v830
        %849 = vmatprep.subr.mxu0 0.0
        %850 = vmatpush1.msra.mxu0 %v831
        %851 = vmatprep.subr.mxu0 0.0
        %852 = vmatpush1.msra.mxu0 %v832
        %853 = vmatprep.subr.mxu0 0.0
        %854 = vmatpush1.msra.mxu0 %v833
        %855 = vmatprep.subr.mxu0 0.0
        %856 = vmatpush1.msra.mxu0 0.0
        %857 = vmatprep.subr.mxu0 0.0
        %858 = vmatpush1.msra.mxu0 0.0
        %859 = vmatprep.subr.mxu0 0.0
        %860 = vmatpush1.msra.mxu0 0.0
        %861 = vmatprep.subr.mxu0 0.0
        %862 = vmatpush1.msra.mxu0 0.0
        %863 = vmatprep.subr.mxu0 0.0
        %864 = vmatpush1.msra.mxu0 0.0
        %865 = vmatprep.subr.mxu0 0.0
        %866 = vmatpush1.msra.mxu0 0.0
        %867 = vmatprep.subr.mxu0 0.0
        %868 = vmatpush1.msra.mxu0 0.0
        %869 = vmatprep.subr.mxu0 0.0
        %870 = vmatpush1.msra.mxu0 0.0
        %871 = vmatprep.subr.mxu0 0.0
        %872 = vmatpush1.msra.mxu0 0.0
        %873 = vmatprep.subr.mxu0 0.0
        %874 = vmatpush1.msra.mxu0 0.0
        %875 = vmatprep.subr.mxu0 0.0
        %876 = vmatpush1.msra.mxu0 0.0
        %877 = vmatprep.subr.mxu0 0.0
        %878 = vmatpush1.msra.mxu0 0.0
        %879 = vmatprep.subr.mxu0 0.0
        %880 = vmatpush1.msra.mxu0 0.0
        %881 = vmatprep.subr.mxu0 0.0
        %882 = vmatpush1.msra.mxu0 0.0
        %883 = vmatprep.subr.mxu0 0.0
        %884 = vmatpush1.msra.mxu0 0.0
        %885 = vmatprep.subr.mxu0 0.0
        %886 = vmatpush1.msra.mxu0 0.0
        %887 = vmatprep.subr.mxu0 0.0
        %888 = vmatpush1.msra.mxu0 0.0
        %889 = vmatprep.subr.mxu0 0.0
        %890 = vmatpush1.msra.mxu0 0.0
        %891 = vmatprep.subr.mxu0 0.0
        %892 = vmatpush1.msra.mxu0 0.0
        %893 = vmatprep.subr.mxu0 0.0
        %894 = vmatpush1.msra.mxu0 0.0
        %895 = vmatprep.subr.mxu0 0.0
        %896 = vmatpush1.msra.mxu0 0.0
        %897 = vmatprep.subr.mxu0 0.0
        %898 = vmatpush1.msra.mxu0 0.0
        %899 = vmatprep.subr.mxu0 0.0
        %900 = vmatpush1.msra.mxu0 0.0
        %901 = vmatprep.subr.mxu0 0.0
        %902 = vmatpush1.msra.mxu0 0.0
        %903 = vmatprep.mubr.f32.mxu0 0.0
        %904 = vmatmul.mubr.f32.gmra.mrb[0].mxu0 %v837
        %v905 = vpop.f32.mrb[0].mxu0
        %v906 = vadd.f32 %v834, %v905
        %v907 = vpop.f32.mrb[0].mxu0
        %908 = vdwg.mxu0
        %v909 = vld [vmem:[%s4 + $0x40] sm:$0xff]
        %v910 = vld [vmem:[%s4 + $0x48] sm:$0xff]
        %v911 = vld [vmem:[%s4 + $0x50] sm:$0xff]
        %v912 = vld [vmem:[%s4 + $0x58] sm:$0xff]
        %v913 = vld [vmem:[%s4 + $0x61] sm:$0x1]
        %v915 = vsel %vm290, %v285, 0
        %917 = vmatprep.subr.mxu0 0.0
        %918 = vmatpush1.msra.mxu0 %v909
        %919 = vmatprep.subr.mxu0 0.0
        %920 = vmatpush1.msra.mxu0 %v910
        %921 = vmatprep.subr.mxu0 0.0
        %922 = vmatpush1.msra.mxu0 %v911
        %923 = vmatprep.subr.mxu0 0.0
        %924 = vmatpush1.msra.mxu0 %v912
        %925 = vmatprep.subr.mxu0 0.0
        %926 = vmatpush1.msra.mxu0 0.0
        %927 = vmatprep.subr.mxu0 0.0
        %928 = vmatpush1.msra.mxu0 0.0
        %929 = vmatprep.subr.mxu0 0.0
        %930 = vmatpush1.msra.mxu0 0.0
        %931 = vmatprep.subr.mxu0 0.0
        %932 = vmatpush1.msra.mxu0 0.0
        %933 = vmatprep.subr.mxu0 0.0
        %934 = vmatpush1.msra.mxu0 0.0
        %935 = vmatprep.subr.mxu0 0.0
        %936 = vmatpush1.msra.mxu0 0.0
        %937 = vmatprep.subr.mxu0 0.0
        %938 = vmatpush1.msra.mxu0 0.0
        %939 = vmatprep.subr.mxu0 0.0
        %940 = vmatpush1.msra.mxu0 0.0
        %941 = vmatprep.subr.mxu0 0.0
        %942 = vmatpush1.msra.mxu0 0.0
        %943 = vmatprep.subr.mxu0 0.0
        %944 = vmatpush1.msra.mxu0 0.0
        %945 = vmatprep.subr.mxu0 0.0
        %946 = vmatpush1.msra.mxu0 0.0
        %947 = vmatprep.subr.mxu0 0.0
        %948 = vmatpush1.msra.mxu0 0.0
        %949 = vmatprep.subr.mxu0 0.0
        %950 = vmatpush1.msra.mxu0 0.0
        %951 = vmatprep.subr.mxu0 0.0
        %952 = vmatpush1.msra.mxu0 0.0
        %953 = vmatprep.subr.mxu0 0.0
        %954 = vmatpush1.msra.mxu0 0.0
        %955 = vmatprep.subr.mxu0 0.0
        %956 = vmatpush1.msra.mxu0 0.0
        %957 = vmatprep.subr.mxu0 0.0
        %958 = vmatpush1.msra.mxu0 0.0
        %959 = vmatprep.subr.mxu0 0.0
        %960 = vmatpush1.msra.mxu0 0.0
        %961 = vmatprep.subr.mxu0 0.0
        %962 = vmatpush1.msra.mxu0 0.0
        %963 = vmatprep.subr.mxu0 0.0
        %964 = vmatpush1.msra.mxu0 0.0
        %965 = vmatprep.subr.mxu0 0.0
        %966 = vmatpush1.msra.mxu0 0.0
        %967 = vmatprep.subr.mxu0 0.0
        %968 = vmatpush1.msra.mxu0 0.0
        %969 = vmatprep.subr.mxu0 0.0
        %970 = vmatpush1.msra.mxu0 0.0
        %971 = vmatprep.subr.mxu0 0.0
        %972 = vmatpush1.msra.mxu0 0.0
        %973 = vmatprep.subr.mxu0 0.0
        %974 = vmatpush1.msra.mxu0 0.0
        %975 = vmatprep.subr.mxu0 0.0
        %976 = vmatpush1.msra.mxu0 0.0
        %977 = vmatprep.subr.mxu0 0.0
        %978 = vmatpush1.msra.mxu0 0.0
        %979 = vmatprep.subr.mxu0 0.0
        %980 = vmatpush1.msra.mxu0 0.0
        %981 = vmatprep.mubr.f32.mxu0 0.0
        %982 = vmatmul.mubr.f32.gmra.mrb[0].mxu0 %v915
        %v983 = vpop.f32.mrb[0].mxu0
        %v984 = vadd.f32 %v913, %v983
        %v985 = vpop.f32.mrb[0].mxu0
        %986 = vdwg.mxu0
        %v987 = vadd.f32 %v906, %v984
        %v988 = vxor.u32 %v987, 2147483648
        %v989 = vmul.f32 %v988, 1.442695
        %v990 = vpow.pop %v989
        %v991 = vadd.f32 %v990, 1.0
        %v992 = vrcp.pop %v991
        %v993 = vmul.f32 1.0, %v992
        %995 = vrot.lane.b32.xlu0 %v984, 64
        %v996 = vpop.permute.xlu0 %995
        %v998 = vmul.f32 %v993, %v996
        %1000 = vrot.lane.b32.xlu0 %v998, 64
        %v1001 = vpop.permute.xlu0 %1000
        %v1003 = vadd.f32 %v906, %v1001
        %v1004 = vtanh.pop %v1003
        %v1005 = vsub.f32 1.0, %v993
        %1007 = vrot.lane.b32.xlu0 %v1004, 96
        %v1008 = vpop.permute.xlu0 %1007
        %v1010 = vmul.f32 %v1005, %v1008
        %v1011 = vlaneseq
        %v1012 = vshrl.u32 %v1011, 7
        %v1013 = vsub.s32 0, %v1012
        %v1014 = vrot.slane %v285, %v1013
        %1015 = vrot.lane.b32.xlu0 %v1014, 32
        %v1016 = vpop.permute.xlu0 %1015
        %v1018 = vmul.f32 %v993, %v1016
        %v1019 = vadd.f32 %v1010, %v1018
        %1021 = vrot.lane.b32.xlu0 %v1019, 96
        %v1022 = vpop.permute.xlu0 %1021
        %s1024 = scalar_lea.vmem %s6, %s20
        %1025 = vst.msk [vmem:[%s1024] sm:$0x1] %vm785, %v1022
        %1026 = vst.msk [vmem:[#allocation2] sm:$0x1] %vm785, %v1022
        // Predicated region
        $region53: #{tpu_custom_call.1} parent=39 // pred_check
          %p1027 = pneg %p138
        $region54: #{tpu_custom_call.1} parent=39 // pred_check_branch
          %1029 = sbr.rel (%p1027) target = $region56
        $region55: #{tpu_custom_call.1} parent=39 // pred_region
          _
        $region56: #{tpu_custom_call.1} parent=39 // pred_fallthru
          _
        // Predicated region
        $region57: #{tpu_custom_call.1} parent=39 // pred_check
          %p1030 = pneg %p159
        $region58: #{tpu_custom_call.1} parent=39 // pred_check_branch
          %1032 = sbr.rel (%p1030) target = $region60
        $region59: #{tpu_custom_call.1} parent=39 // pred_region
          _
        $region60: #{tpu_custom_call.1} parent=39 // pred_fallthru
          _
        // Predicated region
        $region61: #{tpu_custom_call.1} parent=39 // pred_check
          %p1033 = pneg %p138
        $region62: #{tpu_custom_call.1} parent=39 // pred_check_branch
          %1035 = sbr.rel (%p1033) target = $region64
        $region63: #{tpu_custom_call.1} parent=39 // pred_region
          _
        $region64: #{tpu_custom_call.1} parent=39 // pred_fallthru
          _
        // Predicated region
        $region65: #{tpu_custom_call.1} parent=39 // pred_check
          %p1036 = pneg %p159
        $region66: #{tpu_custom_call.1} parent=39 // pred_check_branch
          %1038 = sbr.rel (%p1036) target = $region68
        $region67: #{tpu_custom_call.1} parent=39 // pred_region
          _
        $region68: #{tpu_custom_call.1} parent=39 // pred_fallthru
          _
      $region40: #{tpu_custom_call.1} parent=5 // pred_fallthru
        _
      %p1039 = scmp.le.s32.totalorder 2, %s15
      // Predicated region
      $region69: #{tpu_custom_call.1} parent=5 // pred_check
        %p1040 = pneg %p1039
      $region70: #{tpu_custom_call.1} parent=5 // pred_check_branch
        %1042 = sbr.rel (%p1040) target = $region72
      $region71: #{tpu_custom_call.1} parent=5 // pred_region
        %s1043 = ssub.s32 %s15, 2
      $region72: #{tpu_custom_call.1} parent=5 // pred_fallthru
        _
    $region6: #{tpu_custom_call.1} parent=1 // loop_footer
      %s19 = sadd.s32 1, %s15
    $region7: #{tpu_custom_call.1} parent=1 // loop_footer_branch
      %14 = sbr.rel target = $region3
    $region8: #{tpu_custom_call.1} parent=1 // loop_exit
      _
    %1044 = vsyncpa [#allocation4], 1
    %s1045 = scalar_lea.sflag [#allocation4], 1
    %1046 = vsyncpa %s1045, 1
    %1047 = vsyncpa [#allocation6], 1

</llo_original>
